<compile_context>
chip_gen: v5e
topology: v5e:2x2
jax: 0.10.0
libtpu: 0.0.40
codegen_flags: <defaults>
</compile_context>

<pallas_src>
import jax
import jax.numpy as jnp
from jax.experimental import pallas as pl
from jax.experimental.pallas import tpu as pltpu


def local_attention_kernel(x_ref, w_cat_ref, b_att_ref, b_cnn_ref, o_ref, zpad_ref):
    # x_ref:     (Bc, L, E)           batch chunk (the only per-step DMA)
    # w_cat_ref: (E, W + C)           [w_att^T | w_cnn^T], resident
    # b_att_ref: (1,)                 attention conv bias (SMEM scalar)
    # b_cnn_ref: (C, 1)               cnn conv bias (transposed for the (C, Bc) output)
    # o_ref:     (C, Bc)              pooled output for this chunk, lane-dense on Bc
    # zpad_ref:  (Bc, L + 2*APAD, W)  halo scratch for the window sum, APAD % 8 == 0
    Bc, L, E = x_ref.shape
    C = b_cnn_ref.shape[0]
    W = w_cat_ref.shape[1] - C
    P = (W - 1) // 2
    total = zpad_ref.shape[1]
    APAD = (total - L) // 2

    x2d = x_ref[...].reshape(Bc * L, E).astype(jnp.float32)

    # ---- ONE fused MXU pass over the chunk: [z | u] = x @ [w_att^T | w_cnn^T] -------
    zu = jnp.dot(x2d, w_cat_ref[...], preferred_element_type=jnp.float32)  # (Bc*L, W+C)
    z3 = zu[:, :W].reshape(Bc, L, W)     # attention projections per window offset w
    u3 = zu[:, W:].reshape(Bc, L, C)     # ungated CNN projections

    # ---- window sum s[b,l] = sum_w z[b, l+w-P, w] via a zero-halo scratch -----------
    # Zero only the (sublane-aligned) halo strips; the body rows are fully overwritten
    # every step, so no full-buffer fill and no cross-step state.
    tstart = ((APAD + L) // 8) * 8       # aligned start for the trailing strip (<= APAD+L)
    zpad_ref[:, :APAD, :] = jnp.zeros((Bc, APAD, W), jnp.float32)
    zpad_ref[:, tstart:, :] = jnp.zeros((Bc, total - tstart, W), jnp.float32)
    zpad_ref[:, APAD:APAD + L, :] = z3   # aligned body store (APAD % 8 == 0)

    # Read only the rows the window touches: padded rows [APAD-P, APAD+L+P).
    zp = zpad_ref[:, APAD - P:APAD + L + P, :]                  # (Bc, L+2P, W)
    s = zp[:, 0:L, 0:1]                                         # w = 0 term
    for w in range(1, W):                                       # W static -> unrolled
        s = s + zp[:, w:w + L, w:w + 1]                         # (Bc, L, 1)
    scores = jax.nn.sigmoid(s + b_att_ref[0])                   # (Bc, L, 1)

    # ---- gate after the dot (scores commute with the (1,E) conv): C lanes only ------
    y = u3 * scores                                             # (Bc, L, C)

    # ---- MaxPool2d((L,1)), tanh hoisted past the max (exact: tanh monotone) ---------
    ymax = jnp.max(y, axis=1)                                   # (Bc, C)
    # Store transposed so the output store is lane-dense (Bc on the lane axis).
    o_ref[...] = jnp.tanh(ymax.T + b_cnn_ref[...])              # (C, Bc)


def _choose_chunk(B, L, E, elem_bytes):
    """Pick the per-grid-step batch chunk: ~2 MiB of streamed x per step, and for
    B >= 16 keep at least 2 grid steps so v7x's two TensorCores both get work."""
    row_bytes = L * E * elem_bytes
    bc = max(1, (2 << 20) // row_bytes)
    bc = min(bc, B)
    if B >= 16 and pl.cdiv(B, bc) < 2:
        half = (B + 1) // 2
        bc = ((half + 7) // 8) * 8
    if bc > 8:
        bc = (bc // 8) * 8
    return bc


def local_attention(x, w_att, b_att, w_cnn, b_cnn, win_size, *, stream_dtype=jnp.float32):
    """x: (B, L, E).  w_att: (W, E), b_att: scalar, w_cnn: (C, E), b_cnn: (C,).
    Returns (B, C, 1, 1), matching PyTorch LocalAttention.forward."""
    B, L, E = x.shape
    W = int(win_size)
    assert W % 2 == 1, "win_size must be odd (PyTorch module assumes symmetric padding)"
    C = w_cnn.shape[0]
    P = (W - 1) // 2
    APAD = max(8, ((P + 7) // 8) * 8)            # sublane-aligned halo width

    elem_bytes = jnp.dtype(stream_dtype).itemsize
    bc = _choose_chunk(B, L, E, elem_bytes)
    G = pl.cdiv(B, bc)
    Bpad = G * bc

    xs = jnp.asarray(x, stream_dtype)
    if Bpad != B:
        xs = jnp.pad(xs, ((0, Bpad - B), (0, 0), (0, 0)))       # pad batch only

    # Concatenated resident weight: one (E, W+C) matmul per chunk.
    w_cat = jnp.concatenate([jnp.asarray(w_att, jnp.float32).T,     # (E, W)
                             jnp.asarray(w_cnn, jnp.float32).T],    # (E, C)
                            axis=1)                                  # (E, W+C)
    b_att_a = jnp.asarray(b_att, jnp.float32).reshape(1)             # SMEM scalar
    b_cnn_a = jnp.asarray(b_cnn, jnp.float32).reshape(C, 1)          # (C, 1)

    # Explicit VMEM budget: double-buffered x + resident weights + intermediates +
    # scratch, clipped to <= 48 MiB so the v6e-tuned tiling also fits v7x (64 MiB phys).
    x_tile = bc * L * E * elem_bytes
    interm = 4 * bc * L * (W + C) * 4
    scratch_bytes = bc * (L + 2 * APAD) * W * 4
    est = 2 * x_tile + interm + 2 * scratch_bytes + (E * (W + C) + C) * 4 + (2 << 20)
    vmem_limit = int(min(48 << 20, max(32 << 20, est)))

    out = pl.pallas_call(
        local_attention_kernel,
        out_shape=jax.ShapeDtypeStruct((G, C, bc), jnp.float32),
        grid=(G,),
        in_specs=[
            pl.BlockSpec((bc, L, E), lambda g: (g, 0, 0)),            # x (only per-step DMA)
            pl.BlockSpec((E, W + C), lambda g: (0, 0)),               # [w_att^T | w_cnn^T]
            pl.BlockSpec(memory_space=pltpu.MemorySpace.SMEM),        # b_att scalar
            pl.BlockSpec((C, 1), lambda g: (0, 0)),                   # b_cnn
        ],
        out_specs=pl.BlockSpec((None, C, bc), lambda g: (g, 0, 0)),   # lane-dense (C, bc)
        scratch_shapes=[pltpu.VMEM((bc, L + 2 * APAD, W), jnp.float32)],
        compiler_params=pltpu.CompilerParams(
            dimension_semantics=("parallel",),
            vmem_limit_bytes=vmem_limit),
    )(xs, w_cat, b_att_a, b_cnn_a)

    # (G, C, bc) -> (Bpad, C) -> drop batch padding -> (B, C, 1, 1) as in PyTorch.
    out = out.transpose(0, 2, 1).reshape(Bpad, C)[:B]
    return out.reshape(B, C, 1, 1)


def local_attention_reference(x, w_att, b_att, w_cnn, b_cnn, win_size):
    """Pure-JAX reference mirroring the PyTorch forward."""
    B, L, E = x.shape
    W = win_size
    P = (W - 1) // 2
    x_pad = jnp.pad(x, ((0, 0), (P, P), (0, 0)))
    windows = jnp.stack([x_pad[:, w:w + L, :] for w in range(W)], axis=2)  # (B,L,W,E)
    s = jnp.einsum('blwe,we->bl', windows, w_att) + b_att
    scores = jax.nn.sigmoid(s)[..., None]                                  # (B,L,1)
    out = x * scores
    y = jnp.tanh(jnp.einsum('ble,ce->blc', out, w_cnn) + b_cnn)            # (B,L,C)
    return jnp.max(y, axis=1).reshape(B, -1, 1, 1)                         # (B,C,1,1)


if __name__ == "__main__":
    # Module hyperparameters (small, consistent with the forward pass).
    input_size = 16    # L  (sequence length; also MaxPool window)
    embed_size = 32    # E
    win_size = 5       # W  (odd)
    out_channels = 8   # C
    batch = 2

    key = jax.random.PRNGKey(0)
    kx, k1, k2, k3, k4 = jax.random.split(key, 5)

    x = jax.random.normal(kx, (batch, input_size, embed_size), jnp.float32)

    # Deterministic parameter init (shapes match nn.Conv2d weights/biases).
    # attention_layer conv: weight (1,1,W,E) -> (W,E), bias (1,) -> scalar
    w_att = 0.1 * jax.random.normal(k1, (win_size, embed_size), jnp.float32)
    b_att = 0.1 * jax.random.normal(k2, (), jnp.float32)
    # cnn conv: weight (C,1,1,E) -> (C,E), bias (C,)
    w_cnn = 0.1 * jax.random.normal(k3, (out_channels, embed_size), jnp.float32)
    b_cnn = 0.1 * jax.random.normal(k4, (out_channels,), jnp.float32)

    result = local_attention(x, w_att, b_att, w_cnn, b_cnn, win_size)
    result = jax.block_until_ready(result)

    ref = local_attention_reference(x, w_att, b_att, w_cnn, b_cnn, win_size)
    assert result.shape == (batch, out_channels, 1, 1), result.shape
    assert jnp.allclose(result, ref, rtol=1e-5, atol=1e-5), \
        f"max err {jnp.max(jnp.abs(result - ref))}"

    print("KERNEL_OK")
</pallas_src>

<mosaic_0001>
module attributes {stable_mosaic.version = 11 : i64} {
  func.func @local_attention_kernel(%arg0: i32, %arg1: memref<2x16x32xf32, #tpu.memory_space<vmem>>, %arg2: memref<32x13xf32, #tpu.memory_space<vmem>>, %arg3: memref<1xf32, #tpu.memory_space<smem>>, %arg4: memref<8x1xf32, #tpu.memory_space<vmem>>, %arg5: memref<1x8x2xf32, #tpu.memory_space<vmem>>, %arg6: memref<2x32x5xf32, #tpu.memory_space<vmem>>) attributes {dimension_semantics = [#tpu.dimension_semantics<parallel>], iteration_bounds = array<i64: 1>, scalar_prefetch = 0 : i64, scratch_operands = 1 : i64, tpu.core_type = #tpu.core_type<tc>, window_params = [{transform_indices = @transform_0, window_bounds = array<i64: 2, 16, 32>}, {pipeline_mode = #tpu.pipeline_mode<synchronous>, transform_indices = @transform_1, window_bounds = array<i64: 32, 13>}, {transform_indices = @transform_2, window_bounds = array<i64: 1>}, {pipeline_mode = #tpu.pipeline_mode<synchronous>, transform_indices = @transform_3, window_bounds = array<i64: 8, 1>}, {transform_indices = @transform_4, window_bounds = array<i64: 1, 8, 2>}]} {
    %c0 = arith.constant 0 : index
    %c0_0 = arith.constant 0 : index
    %c0_1 = arith.constant 0 : index
    %0 = vector.load %arg1[%c0, %c0_0, %c0_1] : memref<2x16x32xf32, #tpu.memory_space<vmem>>, vector<2x16x32xf32>
    %1 = vector.shape_cast %0 : vector<2x16x32xf32> to vector<32x32xf32>
    %c0_2 = arith.constant 0 : index
    %c0_3 = arith.constant 0 : index
    %2 = vector.load %arg2[%c0_2, %c0_3] : memref<32x13xf32, #tpu.memory_space<vmem>>, vector<32x13xf32>
    %cst = arith.constant dense<0.000000e+00> : vector<32x13xf32>
    %3 = tpu.matmul %1, %2, %cst {dimension_numbers = #tpu.dot_dimension_numbers<[1], [0], [0], [1], [0, 0, 1, 1], [], []>} : vector<32x32xf32>, vector<32x13xf32>, vector<32x13xf32> -> vector<32x13xf32>
    %4 = vector.extract_strided_slice %3 {offsets = [0, 0], sizes = [32, 5], strides = [1, 1]} : vector<32x13xf32> to vector<32x5xf32>
    %5 = vector.shape_cast %4 : vector<32x5xf32> to vector<2x16x5xf32>
    %6 = vector.extract_strided_slice %3 {offsets = [0, 5], sizes = [32, 8], strides = [1, 1]} : vector<32x13xf32> to vector<32x8xf32>
    %7 = vector.shape_cast %6 : vector<32x8xf32> to vector<2x16x8xf32>
    %cst_4 = arith.constant 0.000000e+00 : f32
    %8 = vector.broadcast %cst_4 : f32 to vector<2x8x5xf32>
    %c0_5 = arith.constant 0 : index
    %c0_6 = arith.constant 0 : index
    %c0_7 = arith.constant 0 : index
    %9 = vector.load %arg6[%c0_5, %c0_6, %c0_7] : memref<2x32x5xf32, #tpu.memory_space<vmem>>, vector<2x8x5xf32>
    tpu.vector_store %arg6[%c0_5, %c0_6, %c0_7], %8 {strides = array<i32>} : memref<2x32x5xf32, #tpu.memory_space<vmem>>, vector<2x8x5xf32>,
    %cst_8 = arith.constant 0.000000e+00 : f32
    %10 = vector.broadcast %cst_8 : f32 to vector<2x8x5xf32>
    %c0_9 = arith.constant 0 : index
    %c24 = arith.constant 24 : index
    %c0_10 = arith.constant 0 : index
    %11 = vector.load %arg6[%c0_9, %c24, %c0_10] : memref<2x32x5xf32, #tpu.memory_space<vmem>>, vector<2x8x5xf32>
    tpu.vector_store %arg6[%c0_9, %c24, %c0_10], %10 {strides = array<i32>} : memref<2x32x5xf32, #tpu.memory_space<vmem>>, vector<2x8x5xf32>,
    %c0_11 = arith.constant 0 : index
    %c8 = arith.constant 8 : index
    %c0_12 = arith.constant 0 : index
    %12 = vector.load %arg6[%c0_11, %c8, %c0_12] : memref<2x32x5xf32, #tpu.memory_space<vmem>>, vector<2x16x5xf32>
    tpu.vector_store %arg6[%c0_11, %c8, %c0_12], %5 {strides = array<i32>} : memref<2x32x5xf32, #tpu.memory_space<vmem>>, vector<2x16x5xf32>,
    %c0_13 = arith.constant 0 : index
    %c6 = arith.constant 6 : index
    %c0_14 = arith.constant 0 : index
    %13 = vector.load %arg6[%c0_13, %c6, %c0_14] : memref<2x32x5xf32, #tpu.memory_space<vmem>>, vector<2x20x5xf32>
    %14 = vector.extract_strided_slice %13 {offsets = [0, 0, 0], sizes = [2, 16, 1], strides = [1, 1, 1]} : vector<2x20x5xf32> to vector<2x16x1xf32>
    %15 = vector.extract_strided_slice %13 {offsets = [0, 1, 1], sizes = [2, 16, 1], strides = [1, 1, 1]} : vector<2x20x5xf32> to vector<2x16x1xf32>
    %16 = arith.addf %14, %15 : vector<2x16x1xf32>
    %17 = vector.extract_strided_slice %13 {offsets = [0, 2, 2], sizes = [2, 16, 1], strides = [1, 1, 1]} : vector<2x20x5xf32> to vector<2x16x1xf32>
    %18 = arith.addf %16, %17 : vector<2x16x1xf32>
    %19 = vector.extract_strided_slice %13 {offsets = [0, 3, 3], sizes = [2, 16, 1], strides = [1, 1, 1]} : vector<2x20x5xf32> to vector<2x16x1xf32>
    %20 = arith.addf %18, %19 : vector<2x16x1xf32>
    %21 = vector.extract_strided_slice %13 {offsets = [0, 4, 4], sizes = [2, 16, 1], strides = [1, 1, 1]} : vector<2x20x5xf32> to vector<2x16x1xf32>
    %22 = arith.addf %20, %21 : vector<2x16x1xf32>
    %c0_15 = arith.constant 0 : index
    %23 = memref.load %arg3[%c0_15] : memref<1xf32, #tpu.memory_space<smem>>
    %24 = vector.broadcast %23 : f32 to vector<2x16x1xf32>
    %25 = arith.addf %22, %24 : vector<2x16x1xf32>
    %26 = arith.negf %25 : vector<2x16x1xf32>
    %27 = math.exp %26 : vector<2x16x1xf32>
    %cst_16 = arith.constant 1.000000e+00 : f32
    %28 = vector.broadcast %cst_16 : f32 to vector<2x16x1xf32>
    %29 = arith.addf %28, %27 : vector<2x16x1xf32>
    %30 = arith.divf %28, %29 : vector<2x16x1xf32>
    %31 = vector.broadcast %30 : vector<2x16x1xf32> to vector<2x16x8xf32>
    %32 = arith.mulf %7, %31 : vector<2x16x8xf32>
    %cst_17 = arith.constant dense<0xFF800000> : vector<2x8xf32>
    %33 = vector.multi_reduction <maximumf>, %32, %cst_17 [1] : vector<2x16x8xf32> to vector<2x8xf32>
    %34 = tpu.transpose %33, [1, 0] : vector<2x8xf32> -> vector<8x2xf32>
    %c0_18 = arith.constant 0 : index
    %c0_19 = arith.constant 0 : index
    %35 = vector.load %arg4[%c0_18, %c0_19] : memref<8x1xf32, #tpu.memory_space<vmem>>, vector<8x1xf32>
    %36 = vector.broadcast %35 : vector<8x1xf32> to vector<8x2xf32>
    %37 = arith.addf %34, %36 : vector<8x2xf32>
    %38 = math.tanh %37 : vector<8x2xf32>
    %c0_20 = arith.constant 0 : index
    %c0_21 = arith.constant 0 : index
    %c0_22 = arith.constant 0 : index
    %39 = vector.load %arg5[%c0_20, %c0_21, %c0_22] : memref<1x8x2xf32, #tpu.memory_space<vmem>>, vector<1x8x2xf32>
    %40 = vector.shape_cast %39 : vector<1x8x2xf32> to vector<8x2xf32>
    %41 = vector.shape_cast %38 : vector<8x2xf32> to vector<1x8x2xf32>
    tpu.vector_store %arg5[%c0_20, %c0_21, %c0_22], %41 {strides = array<i32>} : memref<1x8x2xf32, #tpu.memory_space<vmem>>, vector<1x8x2xf32>,
    return
  }
  func.func @transform_0(%arg0: i32) -> (i32, i32, i32) {
    %c0_i32 = arith.constant 0 : i32
    %c0_i32_0 = arith.constant 0 : i32
    %c0_i32_1 = arith.constant 0 : i32
    return %arg0, %c0_i32, %c0_i32_0 : i32, i32, i32
  }
  func.func @transform_1(%arg0: i32) -> (i32, i32) {
    %c0_i32 = arith.constant 0 : i32
    %c0_i32_0 = arith.constant 0 : i32
    %c0_i32_1 = arith.constant 0 : i32
    return %c0_i32, %c0_i32_0 : i32, i32
  }
  func.func @transform_2(%arg0: i32) -> i32 {
    %c0_i32 = arith.constant 0 : i32
    %c0_i32_0 = arith.constant 0 : i32
    return %c0_i32 : i32
  }
  func.func @transform_3(%arg0: i32) -> (i32, i32) {
    %c0_i32 = arith.constant 0 : i32
    %c0_i32_0 = arith.constant 0 : i32
    %c0_i32_1 = arith.constant 0 : i32
    return %c0_i32, %c0_i32_0 : i32, i32
  }
  func.func @transform_4(%arg0: i32) -> (i32, i32, i32) {
    %c0_i32 = arith.constant 0 : i32
    %c0_i32_0 = arith.constant 0 : i32
    %c0_i32_1 = arith.constant 0 : i32
    return %arg0, %c0_i32, %c0_i32_0 : i32, i32, i32
  }
}

</mosaic_0001>

<llo_original>
// kernel: tpu_custom_call.1
$region0: #{tpu_custom_call.1}
  #allocation0 [shape = 'u32[]', space=smem, size = 0x4, offset = 0x4, fixed_abs, tag = 'smem constant byte address 0x4 - core index']
  #allocation1 [shape = 'u32[72,128]{1,0:T(1,128)}', space=vmem, size = 0x9000, scoped, tag = 'internal scratch']
  #allocation2 [shape = 'f32[2,32,5]{2,1,0:T(8,128)}', space=vmem, size = 0x8000, scoped, tag = 'scratch operand']
  #allocation3 [shape = 'f32[1]{0:T(128)S(6)}', space=smem, size = 0x200, scoped, tag = 'scoped memory for tpu_custom_call.1']
  %s0 = inlined_call_operand.vmem [shape: f32[2,16,32], index: 0, kind: input, shape index: {}]
  %s1 = inlined_call_operand.vmem [shape: f32[32,13], index: 1, kind: input, shape index: {}]
  %s2 = inlined_call_operand.<no memory space> [shape: f32[1], index: 2, kind: input, shape index: {}]
  %s3 = inlined_call_operand.vmem [shape: f32[8,1], index: 3, kind: input, shape index: {}]
  %s4 = inlined_call_operand.vmem [shape: f32[1,8,2], index: 4, kind: output, shape index: {}]
  %s5 = sld [smem:[#allocation0]]
  $region26: #{tpu_custom_call.1} parent=0
    _
  %s7 = ssub.s32 1, %s5
  %s8 = scalar_select 0, %s7, %s5
  %9 = sst [smem:[#allocation3]] %s2
  // Predicated region
  $region2: #{tpu_custom_call.1} parent=0 // pred_check
    _
  $region3: #{tpu_custom_call.1} parent=0 // pred_check_branch
    %11 = sbr.rel (0) target = $region5
  $region4: #{tpu_custom_call.1} parent=0 // pred_region
    _
  $region5: #{tpu_custom_call.1} parent=0 // pred_fallthru
    _
  // Predicated region
  $region6: #{tpu_custom_call.1} parent=0 // pred_check
    _
  $region7: #{tpu_custom_call.1} parent=0 // pred_check_branch
    %13 = sbr.rel (0) target = $region9
  $region8: #{tpu_custom_call.1} parent=0 // pred_region
    _
  $region9: #{tpu_custom_call.1} parent=0 // pred_fallthru
    _
  // Predicated region
  $region10: #{tpu_custom_call.1} parent=0 // pred_check
    _
  $region11: #{tpu_custom_call.1} parent=0 // pred_check_branch
    %15 = sbr.rel (0) target = $region13
  $region12: #{tpu_custom_call.1} parent=0 // pred_region
    _
  $region13: #{tpu_custom_call.1} parent=0 // pred_fallthru
    _
  // Predicated region
  $region14: #{tpu_custom_call.1} parent=0 // pred_check
    _
  $region15: #{tpu_custom_call.1} parent=0 // pred_check_branch
    %17 = sbr.rel (0) target = $region17
  $region16: #{tpu_custom_call.1} parent=0 // pred_region
    _
  $region17: #{tpu_custom_call.1} parent=0 // pred_fallthru
    _
  %v18 = vld [vmem:[%s0] sm:$0xff]
  %v19 = vld [vmem:[%s0 + $0x8] sm:$0xff]
  %v20 = vld [vmem:[%s0 + $0x10] sm:$0xff]
  %v21 = vld [vmem:[%s0 + $0x18] sm:$0xff]
  %v22 = vld [vmem:[%s1] sm:$0xff]
  %v23 = vld [vmem:[%s1 + $0x8] sm:$0xff]
  %v24 = vld [vmem:[%s1 + $0x10] sm:$0xff]
  %v25 = vld [vmem:[%s1 + $0x18] sm:$0xff]
  %vm26 = vcmask 261120
  %v28 = vsel %vm26, %v18, 0
  %v31 = vsel %vm26, %v19, 0
  %v34 = vsel %vm26, %v20, 0
  %v37 = vsel %vm26, %v21, 0
  %39 = vmatpush.msra.mxu0 0.0
  %40 = vmatpush.msra.mxu0 0.0
  %41 = vmatpush.msra.mxu0 0.0
  %42 = vmatpush.msra.mxu0 0.0
  %43 = vmatpush.msra.mxu0 0.0
  %44 = vmatpush.msra.mxu0 0.0
  %45 = vmatpush.msra.mxu0 0.0
  %46 = vmatpush.msra.mxu0 0.0
  %47 = vmatpush.msra.mxu0 0.0
  %48 = vmatpush.msra.mxu0 0.0
  %49 = vmatpush.msra.mxu0 0.0
  %50 = vmatpush.msra.mxu0 0.0
  %51 = vmatpush.msra.mxu0 %v25
  %52 = vmatpush.msra.mxu0 %v24
  %53 = vmatpush.msra.mxu0 %v23
  %54 = vmatpush.msra.mxu0 %v22
  %55 = vmatmul.f32.gmra.mxu0 %v28
  %v56 = vpop.f32.mrf.mxu0
  %v57 = vadd.f32 0.0, %v56
  %58 = vmatmul.f32.gmra.mxu0 %v31
  %v59 = vpop.f32.mrf.mxu0
  %v60 = vadd.f32 0.0, %v59
  %61 = vmatmul.f32.gmra.mxu0 %v34
  %v62 = vpop.f32.mrf.mxu0
  %v63 = vadd.f32 0.0, %v62
  %64 = vmatmul.f32.gmra.mxu0 %v37
  %v65 = vpop.f32.mrf.mxu0
  %v66 = vadd.f32 0.0, %v65
  %67 = vdwg.mxu0
  %vm68 = vcmask 39936
  %69 = vst.msk [vmem:[#allocation2] sm:$0xff] %vm68, 0.0
  %70 = vst.msk [vmem:[#allocation2 + $0x20] sm:$0xff] %vm68, 0.0
  %71 = vst.msk [vmem:[#allocation2 + $0x18] sm:$0xff] %vm68, 0.0
  %72 = vst.msk [vmem:[#allocation2 + $0x38] sm:$0xff] %vm68, 0.0
  %73 = vst.msk [vmem:[#allocation2 + $0x8] sm:$0xff] %vm68, %v57
  %74 = vst.msk [vmem:[#allocation2 + $0x10] sm:$0xff] %vm68, %v60
  %75 = vst.msk [vmem:[#allocation2 + $0x28] sm:$0xff] %vm68, %v63
  %76 = vst.msk [vmem:[#allocation2 + $0x30] sm:$0xff] %vm68, %v66
  %v77 = vld [vmem:[#allocation2 + $0x6] sm:$0xff]
  %v78 = vld [vmem:[#allocation2 + $0xe] sm:$0xff]
  %v79 = vld [vmem:[#allocation2 + $0x16] sm:$0xf]
  %v80 = vld [vmem:[#allocation2 + $0x26] sm:$0xff]
  %v81 = vld [vmem:[#allocation2 + $0x2e] sm:$0xff]
  %v82 = vld [vmem:[#allocation2 + $0x36] sm:$0xf]
  %vm89 = vcmask 1046528
  %v90 = vrot.slane %v77, 1
  %v91 = vrot.slane %v78, 1
  %v92 = vsel %vm89, %v90, %v91
  %v93 = vrot.slane %v79, 1
  %v94 = vsel %vm89, %v91, %v93
  %v95 = vrot.slane %v80, 1
  %v96 = vrot.slane %v81, 1
  %v97 = vsel %vm89, %v95, %v96
  %v98 = vrot.slane %v82, 1
  %v99 = vsel %vm89, %v96, %v98
  %100 = vrot.lane.b32.xlu0 %v92, 127
  %v101 = vpop.permute.xlu0 %100
  %102 = vrot.lane.b32.xlu0 %v94, 127
  %v103 = vpop.permute.xlu0 %102
  %104 = vrot.lane.b32.xlu0 %v97, 127
  %v105 = vpop.permute.xlu0 %104
  %106 = vrot.lane.b32.xlu0 %v99, 127
  %v107 = vpop.permute.xlu0 %106
  %v112 = vadd.f32 %v77, %v101
  %v113 = vadd.f32 %v78, %v103
  %v114 = vadd.f32 %v80, %v105
  %v115 = vadd.f32 %v81, %v107
  %vm116 = vcmask 1045504
  %v117 = vrot.slane %v77, 2
  %v118 = vrot.slane %v78, 2
  %v119 = vsel %vm116, %v117, %v118
  %v120 = vrot.slane %v79, 2
  %v121 = vsel %vm116, %v118, %v120
  %v122 = vrot.slane %v80, 2
  %v123 = vrot.slane %v81, 2
  %v124 = vsel %vm116, %v122, %v123
  %v125 = vrot.slane %v82, 2
  %v126 = vsel %vm116, %v123, %v125
  %127 = vrot.lane.b32.xlu0 %v119, 126
  %v128 = vpop.permute.xlu0 %127
  %129 = vrot.lane.b32.xlu0 %v121, 126
  %v130 = vpop.permute.xlu0 %129
  %131 = vrot.lane.b32.xlu0 %v124, 126
  %v132 = vpop.permute.xlu0 %131
  %133 = vrot.lane.b32.xlu0 %v126, 126
  %v134 = vpop.permute.xlu0 %133
  %v139 = vadd.f32 %v112, %v128
  %v140 = vadd.f32 %v113, %v130
  %v141 = vadd.f32 %v114, %v132
  %v142 = vadd.f32 %v115, %v134
  %vm143 = vcmask 1044480
  %v144 = vrot.slane %v77, 3
  %v145 = vrot.slane %v78, 3
  %v146 = vsel %vm143, %v144, %v145
  %v147 = vrot.slane %v79, 3
  %v148 = vsel %vm143, %v145, %v147
  %v149 = vrot.slane %v80, 3
  %v150 = vrot.slane %v81, 3
  %v151 = vsel %vm143, %v149, %v150
  %v152 = vrot.slane %v82, 3
  %v153 = vsel %vm143, %v150, %v152
  %154 = vrot.lane.b32.xlu0 %v146, 125
  %v155 = vpop.permute.xlu0 %154
  %156 = vrot.lane.b32.xlu0 %v148, 125
  %v157 = vpop.permute.xlu0 %156
  %158 = vrot.lane.b32.xlu0 %v151, 125
  %v159 = vpop.permute.xlu0 %158
  %160 = vrot.lane.b32.xlu0 %v153, 125
  %v161 = vpop.permute.xlu0 %160
  %v166 = vadd.f32 %v139, %v155
  %v167 = vadd.f32 %v140, %v157
  %v168 = vadd.f32 %v141, %v159
  %v169 = vadd.f32 %v142, %v161
  %vm170 = vcmask 1043456
  %v171 = vrot.slane %v77, 4
  %v172 = vrot.slane %v78, 4
  %v173 = vsel %vm170, %v171, %v172
  %v174 = vrot.slane %v79, 4
  %v175 = vsel %vm170, %v172, %v174
  %v176 = vrot.slane %v80, 4
  %v177 = vrot.slane %v81, 4
  %v178 = vsel %vm170, %v176, %v177
  %v179 = vrot.slane %v82, 4
  %v180 = vsel %vm170, %v177, %v179
  %181 = vrot.lane.b32.xlu0 %v173, 124
  %v182 = vpop.permute.xlu0 %181
  %183 = vrot.lane.b32.xlu0 %v175, 124
  %v184 = vpop.permute.xlu0 %183
  %185 = vrot.lane.b32.xlu0 %v178, 124
  %v186 = vpop.permute.xlu0 %185
  %187 = vrot.lane.b32.xlu0 %v180, 124
  %v188 = vpop.permute.xlu0 %187
  %v193 = vadd.f32 %v166, %v182
  %v194 = vadd.f32 %v167, %v184
  %v195 = vadd.f32 %v168, %v186
  %v196 = vadd.f32 %v169, %v188
  %s197 = sld [smem:[#allocation3]]
  %v198 = vstv %s197
  %v199 = vadd.f32 %v193, %v198
  %v200 = vadd.f32 %v194, %v198
  %v201 = vadd.f32 %v195, %v198
  %v202 = vadd.f32 %v196, %v198
  %v203 = vxor.u32 %v199, 2147483648
  %v204 = vxor.u32 %v200, 2147483648
  %v205 = vxor.u32 %v201, 2147483648
  %v206 = vxor.u32 %v202, 2147483648
  %v207 = vmul.f32 %v203, 1.442695
  %v208 = vpow.pop %v207
  %v209 = vmul.f32 %v204, 1.442695
  %v210 = vpow.pop %v209
  %v211 = vmul.f32 %v205, 1.442695
  %v212 = vpow.pop %v211
  %v213 = vmul.f32 %v206, 1.442695
  %v214 = vpow.pop %v213
  %v215 = vadd.f32 %v208, 1.0
  %v216 = vadd.f32 %v210, 1.0
  %v217 = vadd.f32 %v212, 1.0
  %v218 = vadd.f32 %v214, 1.0
  %v219 = vrcp.pop %v215
  %v220 = vmul.f32 %v215, %v219
  %v221 = vsub.f32 1.0, %v220
  %v222 = vmul.f32 %v219, %v221
  %v223 = vadd.f32 %v219, %v222
  %vm224 = vweird.f32 %v215
  %vm225 = vweird.f32 %v219
  %vm226 = vmor %vm224, %vm225
  %v227 = vsel %vm226, %v219, %v223
  %v228 = vand.u32 2147483647, %v215
  %vm229 = vcmp.eq.f32.partialorder %v228, 8.507059e+37
  %v230 = vand.u32 %v215, 2147483648
  %v231 = vor.u32 1.1754944e-38, %v230
  %v232 = vsel %vm229, %v231, %v227
  %v233 = vmul.f32 1.0, %v232
  %v234 = vrcp.pop %v216
  %v235 = vmul.f32 %v216, %v234
  %v236 = vsub.f32 1.0, %v235
  %v237 = vmul.f32 %v234, %v236
  %v238 = vadd.f32 %v234, %v237
  %vm239 = vweird.f32 %v216
  %vm240 = vweird.f32 %v234
  %vm241 = vmor %vm239, %vm240
  %v242 = vsel %vm241, %v234, %v238
  %v243 = vand.u32 2147483647, %v216
  %vm244 = vcmp.eq.f32.partialorder %v243, 8.507059e+37
  %v245 = vand.u32 %v216, 2147483648
  %v246 = vor.u32 1.1754944e-38, %v245
  %v247 = vsel %vm244, %v246, %v242
  %v248 = vmul.f32 1.0, %v247
  %v249 = vrcp.pop %v217
  %v250 = vmul.f32 %v217, %v249
  %v251 = vsub.f32 1.0, %v250
  %v252 = vmul.f32 %v249, %v251
  %v253 = vadd.f32 %v249, %v252
  %vm254 = vweird.f32 %v217
  %vm255 = vweird.f32 %v249
  %vm256 = vmor %vm254, %vm255
  %v257 = vsel %vm256, %v249, %v253
  %v258 = vand.u32 2147483647, %v217
  %vm259 = vcmp.eq.f32.partialorder %v258, 8.507059e+37
  %v260 = vand.u32 %v217, 2147483648
  %v261 = vor.u32 1.1754944e-38, %v260
  %v262 = vsel %vm259, %v261, %v257
  %v263 = vmul.f32 1.0, %v262
  %v264 = vrcp.pop %v218
  %v265 = vmul.f32 %v218, %v264
  %v266 = vsub.f32 1.0, %v265
  %v267 = vmul.f32 %v264, %v266
  %v268 = vadd.f32 %v264, %v267
  %vm269 = vweird.f32 %v218
  %vm270 = vweird.f32 %v264
  %vm271 = vmor %vm269, %vm270
  %v272 = vsel %vm271, %v264, %v268
  %v273 = vand.u32 2147483647, %v218
  %vm274 = vcmp.eq.f32.partialorder %v273, 8.507059e+37
  %v275 = vand.u32 %v218, 2147483648
  %v276 = vor.u32 1.1754944e-38, %v275
  %v277 = vsel %vm274, %v276, %v272
  %v278 = vmul.f32 1.0, %v277
  %280 = vset.pattern.permute.xlu0 0
  %281 = vperm.xlu0 %280, %v233
  %v282 = vpop.permute.xlu0 %281
  %285 = vset.pattern.permute.xlu0 0
  %286 = vperm.xlu0 %285, %v248
  %v287 = vpop.permute.xlu0 %286
  %290 = vset.pattern.permute.xlu0 0
  %291 = vperm.xlu0 %290, %v263
  %v292 = vpop.permute.xlu0 %291
  %295 = vset.pattern.permute.xlu0 0
  %296 = vperm.xlu0 %295, %v278
  %v297 = vpop.permute.xlu0 %296
  %v299 = vmul.f32 %v57, %v282
  %v300 = vmul.f32 %v60, %v287
  %v301 = vmul.f32 %v63, %v292
  %v302 = vmul.f32 %v66, %v297
  %vm303 = vcmask 105512
  %v304 = vsel %vm303, %v299, -inf
  %v305 = vsel %vm303, %v300, -inf
  %v306 = vmax.f32 %v304, %v305
  %v307 = vrot.slane %v306, 4
  %v308 = vmax.f32 %v306, %v307
  %v309 = vrot.slane %v308, 2
  %v310 = vmax.f32 %v308, %v309
  %v311 = vrot.slane %v310, 1
  %v312 = vmax.f32 %v310, %v311
  %v313 = vsel %vm303, %v301, -inf
  %v314 = vsel %vm303, %v302, -inf
  %v315 = vmax.f32 %v313, %v314
  %v316 = vrot.slane %v315, 4
  %v317 = vmax.f32 %v315, %v316
  %v318 = vrot.slane %v317, 2
  %v319 = vmax.f32 %v317, %v318
  %v320 = vrot.slane %v319, 1
  %v321 = vmax.f32 %v319, %v320
  %vm324 = vcmask 1041409
  %v325 = vsel %vm324, %v321, %v312
  %326 = vrot.lane.b32.xlu0 %v325, 123
  %v327 = vpop.permute.xlu0 %326
  %329 = vxpose.xlu0.b32.start [1/16] %v327, 128
  %330 = vxpose.xlu0.b32.cont [2/16] 0.0, 128
  %331 = vxpose.xlu0.b32.cont [3/16] 0.0, 128
  %332 = vxpose.xlu0.b32.cont [4/16] 0.0, 128
  %333 = vxpose.xlu0.b32.cont [5/16] 0.0, 128
  %334 = vxpose.xlu0.b32.cont [6/16] 0.0, 128
  %335 = vxpose.xlu0.b32.cont [7/16] 0.0, 128
  %336 = vxpose.xlu0.b32.cont [8/16] 0.0, 128
  %337 = vxpose.xlu0.b32.cont [9/16] 0.0, 128
  %338 = vxpose.xlu0.b32.cont [10/16] 0.0, 128
  %339 = vxpose.xlu0.b32.cont [11/16] 0.0, 128
  %340 = vxpose.xlu0.b32.cont [12/16] 0.0, 128
  %341 = vxpose.xlu0.b32.cont [13/16] 0.0, 128
  %342 = vxpose.xlu0.b32.cont [14/16] 0.0, 128
  %343 = vxpose.xlu0.b32.cont [15/16] 0.0, 128
  %344 = vxpose.xlu0.b32.end [16/16] 0.0, 128
  %v345 = vpop.trf.xlu0
  %v346 = vpop.trf.xlu0
  %v347 = vpop.trf.xlu0
  %v348 = vpop.trf.xlu0
  %v349 = vpop.trf.xlu0
  %v350 = vpop.trf.xlu0
  %v351 = vpop.trf.xlu0
  %v352 = vpop.trf.xlu0
  %v353 = vpop.trf.xlu0
  %v354 = vpop.trf.xlu0
  %v355 = vpop.trf.xlu0
  %v356 = vpop.trf.xlu0
  %v357 = vpop.trf.xlu0
  %v358 = vpop.trf.xlu0
  %v359 = vpop.trf.xlu0
  %v360 = vpop.trf.xlu0
  %v361 = vld [vmem:[%s3] sm:$0xff]
  %363 = vset.pattern.permute.xlu0 0
  %364 = vperm.xlu0 %363, %v361
  %v365 = vpop.permute.xlu0 %364
  %v367 = vadd.f32 %v345, %v365
  %v368 = vtanh.pop %v367
  %vm369 = vcmask 15360
  %370 = vst.msk [vmem:[%s4] sm:$0xff] %vm369, %v368
  // Predicated region
  $region18: #{tpu_custom_call.1} parent=0 // pred_check
    _
  $region19: #{tpu_custom_call.1} parent=0 // pred_check_branch
    %372 = sbr.rel (0) target = $region21
  $region20: #{tpu_custom_call.1} parent=0 // pred_region
    _
  $region21: #{tpu_custom_call.1} parent=0 // pred_fallthru
    _
  // Predicated region
  $region22: #{tpu_custom_call.1} parent=0 // pred_check
    _
  $region23: #{tpu_custom_call.1} parent=0 // pred_check_branch
    %374 = sbr.rel (0) target = $region25
  $region24: #{tpu_custom_call.1} parent=0 // pred_region
    _
  $region25: #{tpu_custom_call.1} parent=0 // pred_fallthru
    _

</llo_original>
